<compile_context>
chip_gen: v5e
topology: v5e:2x2
jax: 0.10.0
libtpu: 0.0.40
codegen_flags: <defaults>
</compile_context>

<pallas_src>
import functools

import jax
import jax.numpy as jnp
from jax import lax
from jax.experimental import pallas as pl
from jax.experimental.pallas import tpu as pltpu


def _round_up(v, m):
    return ((v + m - 1) // m) * m


def pnn_kernel(x_ref, x2_ref, p_ref, p2_ref, w_ref, o_ref, acc_ref,
               *, neg_inv_two_sigma2):
    pj = pl.program_id(1)

    @pl.when(pj == 0)
    def _():
        acc_ref[...] = jnp.zeros_like(acc_ref)

    x = x_ref[...]                                   # [bt, D] f32
    p = p_ref[...]                                   # [pt, D] f32

    # Squared-euclidean via the matmul identity.  D-with-D contraction is
    # expressed directly (no transpose of the patterns tile) -> MXU.
    xp = lax.dot_general(x, p, (((1,), (1,)), ((), ())),
                         preferred_element_type=jnp.float32)      # [bt, pt]
    d2 = jnp.maximum(x2_ref[...] + p2_ref[...] - 2.0 * xp, 0.0)   # [bt, pt]

    # RBF kernel: single VPU multiply + EUP exp.
    k = jnp.exp(d2 * neg_inv_two_sigma2)                          # [bt, pt]

    # Fused masked class means: tiny second matmul against the pre-scaled
    # class-weight matrix; accumulates a lane-dense [bt, 128] block.
    acc_ref[...] += jnp.dot(k, w_ref[...],
                            preferred_element_type=jnp.float32)   # [bt, 128]

    @pl.when(pj == pl.num_programs(1) - 1)
    def _():
        o_ref[...] = acc_ref[...]


def pnn_forward(x, patterns, targets, sigma=1.0, *, block_b=128, block_p=256):
    """x: [B, D] f32, patterns: [P, D] f32, targets: [P] int32 in {0, 1}."""
    B, D = x.shape
    P, _ = patterns.shape

    # Tile sizes: bt multiple of 8 (sublanes), pt multiple of 128 (lanes);
    # default pt=256 suits the v6e/v7x 2x256^2 MXU and is also 128-aligned
    # for v5e.  Clamp down for tiny problems so we don't over-pad.
    bt = min(block_b, _round_up(B, 8))
    pt = min(block_p, _round_up(P, 128))
    B_pad = _round_up(B, bt)
    P_pad = _round_up(P, pt)

    # Pad operands (zero rows contribute nothing: W rows beyond P are zero,
    # padded batch rows are sliced off below).
    x_pad = jnp.zeros((B_pad, D), jnp.float32).at[:B].set(
        x.astype(jnp.float32))
    p_pad = jnp.zeros((P_pad, D), jnp.float32).at[:P].set(
        patterns.astype(jnp.float32))

    # Hoisted row norms (computed once, not per grid step).
    x2 = jnp.sum(x_pad * x_pad, axis=-1, keepdims=True)            # [B_pad, 1]
    p2 = jnp.sum(p_pad * p_pad, axis=-1, keepdims=True).T          # [1, P_pad]

    # Pre-scaled class-mean weights.  Column 0 -> normal mean, column 1 ->
    # anomaly mean, lanes 2..127 are zero (lane-dense output store).
    nmask = (targets == 0).astype(jnp.float32)
    amask = (targets == 1).astype(jnp.float32)
    n_cnt = jnp.sum(nmask)
    a_cnt = jnp.sum(amask)
    # NOTE: if a class has zero patterns this divide yields NaN, matching
    # torch.mean over an empty selection.
    w = jnp.zeros((P_pad, 128), jnp.float32)
    w = w.at[:P, 0].set(nmask / n_cnt)
    w = w.at[:P, 1].set(amask / a_cnt)

    neg_inv_two_sigma2 = -1.0 / (2.0 * float(sigma) * float(sigma))
    kernel = functools.partial(pnn_kernel,
                               neg_inv_two_sigma2=neg_inv_two_sigma2)

    out = pl.pallas_call(
        kernel,
        out_shape=jax.ShapeDtypeStruct((B_pad, 128), jnp.float32),
        grid_spec=pltpu.PrefetchScalarGridSpec(
            num_scalar_prefetch=0,
            grid=(B_pad // bt, P_pad // pt),
            in_specs=[
                pl.BlockSpec((bt, D), lambda i, j: (i, 0)),    # x tile
                pl.BlockSpec((bt, 1), lambda i, j: (i, 0)),    # ||x||^2
                pl.BlockSpec((pt, D), lambda i, j: (j, 0)),    # patterns tile
                pl.BlockSpec((1, pt), lambda i, j: (0, j)),    # ||p||^2
                pl.BlockSpec((pt, 128), lambda i, j: (j, 0)),  # class weights
            ],
            out_specs=pl.BlockSpec((bt, 128), lambda i, j: (i, 0)),
            scratch_shapes=[pltpu.VMEM((bt, 128), jnp.float32)],
        ),
        compiler_params=pltpu.CompilerParams(
            dimension_semantics=("parallel", "arbitrary"),
            vmem_limit_bytes=32 * 1024 * 1024,
        ),
    )(x_pad, x2, p_pad, p2, w)

    return out[:B, :2]


def pnn_reference(x, patterns, targets, sigma=1.0):
    """Plain-JAX reference mirroring the PyTorch module."""
    d2 = jnp.sum((x[:, None, :] - patterns[None, :, :]) ** 2, axis=-1)
    k = jnp.exp(-d2 / (2.0 * sigma ** 2))
    nm = (targets == 0).astype(jnp.float32)
    am = (targets == 1).astype(jnp.float32)
    normal = jnp.sum(k * nm[None, :], axis=1) / jnp.sum(nm)
    anomaly = jnp.sum(k * am[None, :], axis=1) / jnp.sum(am)
    return jnp.stack([normal, anomaly], axis=1)


if __name__ == "__main__":
    key = jax.random.PRNGKey(0)
    kx, kp = jax.random.split(key)

    B, P, D = 8, 16, 32        # batch, stored patterns, feature size
    sigma = 1.0

    x = jax.random.normal(kx, (B, D), dtype=jnp.float32)
    patterns = jax.random.normal(kp, (P, D), dtype=jnp.float32)
    # Deterministic targets: half normal (0), half anomaly (1).
    targets = (jnp.arange(P, dtype=jnp.int32) % 2)

    out = pnn_forward(x, patterns, targets, sigma=sigma)
    out = jax.block_until_ready(out)

    ref = pnn_reference(x, patterns, targets, sigma=sigma)
    assert out.shape == (B, 2), out.shape
    assert jnp.allclose(out, ref, atol=1e-4, rtol=1e-4), (out, ref)

    print("KERNEL_OK")
</pallas_src>

<mosaic_0001>
module attributes {stable_mosaic.version = 11 : i64} {
  func.func @pnn_kernel(%arg0: i32, %arg1: i32, %arg2: memref<8x32xf32, #tpu.memory_space<vmem>>, %arg3: memref<8x1xf32, #tpu.memory_space<vmem>>, %arg4: memref<128x32xf32, #tpu.memory_space<vmem>>, %arg5: memref<1x128xf32, #tpu.memory_space<vmem>>, %arg6: memref<128x128xf32, #tpu.memory_space<vmem>>, %arg7: memref<8x128xf32, #tpu.memory_space<vmem>>, %arg8: memref<8x128xf32, #tpu.memory_space<vmem>>) attributes {dimension_semantics = [#tpu.dimension_semantics<parallel>, #tpu.dimension_semantics<arbitrary>], iteration_bounds = array<i64: 1, 1>, scalar_prefetch = 0 : i64, scratch_operands = 1 : i64, tpu.core_type = #tpu.core_type<tc>, window_params = [{transform_indices = @transform_0, window_bounds = array<i64: 8, 32>}, {transform_indices = @transform_1, window_bounds = array<i64: 8, 1>}, {transform_indices = @transform_2, window_bounds = array<i64: 128, 32>}, {transform_indices = @transform_3, window_bounds = array<i64: 1, 128>}, {transform_indices = @transform_4, window_bounds = array<i64: 128, 128>}, {transform_indices = @transform_5, window_bounds = array<i64: 8, 128>}]} {
    %c0_i32 = arith.constant 0 : i32
    %0 = arith.cmpi eq, %arg1, %c0_i32 : i32
    %1 = arith.extui %0 : i1 to i32
    %c0_i32_0 = arith.constant 0 : i32
    %2 = arith.cmpi ne, %1, %c0_i32_0 : i32
    scf.if %2 {
      %cst_20 = arith.constant 0.000000e+00 : f32
      %27 = vector.broadcast %cst_20 : f32 to vector<8x128xf32>
      %c0_21 = arith.constant 0 : index
      %c0_22 = arith.constant 0 : index
      %28 = vector.load %arg8[%c0_21, %c0_22] : memref<8x128xf32, #tpu.memory_space<vmem>>, vector<8x128xf32>
      tpu.vector_store %arg8[%c0_21, %c0_22], %27 {strides = array<i32>} : memref<8x128xf32, #tpu.memory_space<vmem>>, vector<8x128xf32>,
    } else {
    }
    %c0 = arith.constant 0 : index
    %c0_1 = arith.constant 0 : index
    %3 = vector.load %arg2[%c0, %c0_1] : memref<8x32xf32, #tpu.memory_space<vmem>>, vector<8x32xf32>
    %c0_2 = arith.constant 0 : index
    %c0_3 = arith.constant 0 : index
    %4 = vector.load %arg4[%c0_2, %c0_3] : memref<128x32xf32, #tpu.memory_space<vmem>>, vector<128x32xf32>
    %cst = arith.constant dense<0.000000e+00> : vector<8x128xf32>
    %5 = tpu.matmul %3, %4, %cst {dimension_numbers = #tpu.dot_dimension_numbers<[1], [1], [0], [0], [0, 0, 1, 0], [], []>} : vector<8x32xf32>, vector<128x32xf32>, vector<8x128xf32> -> vector<8x128xf32>
    %c0_4 = arith.constant 0 : index
    %c0_5 = arith.constant 0 : index
    %6 = vector.load %arg3[%c0_4, %c0_5] : memref<8x1xf32, #tpu.memory_space<vmem>>, vector<8x1xf32>
    %c0_6 = arith.constant 0 : index
    %c0_7 = arith.constant 0 : index
    %7 = vector.load %arg5[%c0_6, %c0_7] : memref<1x128xf32, #tpu.memory_space<vmem>>, vector<1x128xf32>
    %8 = vector.broadcast %6 : vector<8x1xf32> to vector<8x128xf32>
    %9 = vector.broadcast %7 : vector<1x128xf32> to vector<8x128xf32>
    %10 = arith.addf %8, %9 : vector<8x128xf32>
    %cst_8 = arith.constant 2.000000e+00 : f32
    %11 = vector.broadcast %cst_8 : f32 to vector<8x128xf32>
    %12 = arith.mulf %11, %5 : vector<8x128xf32>
    %13 = arith.subf %10, %12 : vector<8x128xf32>
    %cst_9 = arith.constant 0.000000e+00 : f32
    %14 = vector.broadcast %cst_9 : f32 to vector<8x128xf32>
    %15 = arith.maximumf %13, %14 : vector<8x128xf32>
    %cst_10 = arith.constant -5.000000e-01 : f32
    %16 = vector.broadcast %cst_10 : f32 to vector<8x128xf32>
    %17 = arith.mulf %15, %16 : vector<8x128xf32>
    %18 = math.exp %17 : vector<8x128xf32>
    %c0_11 = arith.constant 0 : index
    %c0_12 = arith.constant 0 : index
    %19 = vector.load %arg8[%c0_11, %c0_12] : memref<8x128xf32, #tpu.memory_space<vmem>>, vector<8x128xf32>
    %c0_13 = arith.constant 0 : index
    %c0_14 = arith.constant 0 : index
    %20 = vector.load %arg6[%c0_13, %c0_14] : memref<128x128xf32, #tpu.memory_space<vmem>>, vector<128x128xf32>
    %cst_15 = arith.constant dense<0.000000e+00> : vector<8x128xf32>
    %21 = tpu.matmul %18, %20, %cst_15 {dimension_numbers = #tpu.dot_dimension_numbers<[1], [0], [0], [1], [0, 0, 1, 1], [], []>} : vector<8x128xf32>, vector<128x128xf32>, vector<8x128xf32> -> vector<8x128xf32>
    %22 = arith.addf %19, %21 : vector<8x128xf32>
    %c0_16 = arith.constant 0 : index
    %c0_17 = arith.constant 0 : index
    %23 = vector.load %arg8[%c0_16, %c0_17] : memref<8x128xf32, #tpu.memory_space<vmem>>, vector<8x128xf32>
    tpu.vector_store %arg8[%c0_16, %c0_17], %22 {strides = array<i32>} : memref<8x128xf32, #tpu.memory_space<vmem>>, vector<8x128xf32>,
    %c0_i32_18 = arith.constant 0 : i32
    %24 = arith.cmpi eq, %arg1, %c0_i32_18 : i32
    %25 = arith.extui %24 : i1 to i32
    %c0_i32_19 = arith.constant 0 : i32
    %26 = arith.cmpi ne, %25, %c0_i32_19 : i32
    scf.if %26 {
      %c0_20 = arith.constant 0 : index
      %c0_21 = arith.constant 0 : index
      %27 = vector.load %arg8[%c0_20, %c0_21] : memref<8x128xf32, #tpu.memory_space<vmem>>, vector<8x128xf32>
      %c0_22 = arith.constant 0 : index
      %c0_23 = arith.constant 0 : index
      %28 = vector.load %arg7[%c0_22, %c0_23] : memref<8x128xf32, #tpu.memory_space<vmem>>, vector<8x128xf32>
      tpu.vector_store %arg7[%c0_22, %c0_23], %27 {strides = array<i32>} : memref<8x128xf32, #tpu.memory_space<vmem>>, vector<8x128xf32>,
    } else {
    }
    return
  }
  func.func @transform_0(%arg0: i32, %arg1: i32) -> (i32, i32) {
    %c0_i32 = arith.constant 0 : i32
    %c0_i32_0 = arith.constant 0 : i32
    return %arg0, %c0_i32 : i32, i32
  }
  func.func @transform_1(%arg0: i32, %arg1: i32) -> (i32, i32) {
    %c0_i32 = arith.constant 0 : i32
    %c0_i32_0 = arith.constant 0 : i32
    return %arg0, %c0_i32 : i32, i32
  }
  func.func @transform_2(%arg0: i32, %arg1: i32) -> (i32, i32) {
    %c0_i32 = arith.constant 0 : i32
    %c0_i32_0 = arith.constant 0 : i32
    return %arg1, %c0_i32 : i32, i32
  }
  func.func @transform_3(%arg0: i32, %arg1: i32) -> (i32, i32) {
    %c0_i32 = arith.constant 0 : i32
    %c0_i32_0 = arith.constant 0 : i32
    return %c0_i32, %arg1 : i32, i32
  }
  func.func @transform_4(%arg0: i32, %arg1: i32) -> (i32, i32) {
    %c0_i32 = arith.constant 0 : i32
    %c0_i32_0 = arith.constant 0 : i32
    return %arg1, %c0_i32 : i32, i32
  }
  func.func @transform_5(%arg0: i32, %arg1: i32) -> (i32, i32) {
    %c0_i32 = arith.constant 0 : i32
    %c0_i32_0 = arith.constant 0 : i32
    return %arg0, %c0_i32 : i32, i32
  }
}

</mosaic_0001>

<llo_original>
// kernel: tpu_custom_call.1
$region0: #{tpu_custom_call.1}
  #allocation0 [shape = 'u32[]', space=smem, size = 0x4, offset = 0x4, fixed_abs, tag = 'smem constant byte address 0x4 - core index']
  #allocation1 [shape = 'u32[72,128]{1,0:T(1,128)}', space=vmem, size = 0x9000, scoped, tag = 'internal scratch']
  #allocation2 [shape = 'f32[8,128]{1,0:T(8,128)}', space=vmem, size = 0x1000, scoped, tag = 'scratch operand']
  %s0 = inlined_call_operand.vmem [shape: f32[8,32], index: 0, kind: input, shape index: {}]
  %s1 = inlined_call_operand.vmem [shape: f32[8,1], index: 1, kind: input, shape index: {}]
  %s2 = inlined_call_operand.vmem [shape: f32[128,32], index: 2, kind: input, shape index: {}]
  %s3 = inlined_call_operand.vmem [shape: f32[1,128], index: 3, kind: input, shape index: {}]
  %s4 = inlined_call_operand.vmem [shape: f32[128,128], index: 4, kind: input, shape index: {}]
  %s5 = inlined_call_operand.hbm [shape: f32[8,128], index: 5, kind: output, shape index: {}]
  %s6 = sld [smem:[#allocation0]]
  $region38: #{tpu_custom_call.1} parent=0
    _
  %s8 = ssub.s32 1, %s6
  %s9 = scalar_select 0, %s8, %s6
  $region1: #{tpu_custom_call.1} parent=0
    #allocation3 [shape = 'u8[4096]{0}', space=vmem, size = 0x1000, scoped, tag = 'output window, operand 0, single buffered']
    #allocation4 [shape = 's32[1]{0}', space=sflag, size = 0x4, scoped, tag = 'scoped memory for tpu_custom_call.1']
    %10 = vsyncpa [#allocation4], 0
    // Predicated region
    $region2: #{tpu_custom_call.1} parent=1 // pred_check
      _
    $region3: #{tpu_custom_call.1} parent=1 // pred_check_branch
      %12 = sbr.rel (0) target = $region5
    $region4: #{tpu_custom_call.1} parent=1 // pred_region
      _
    $region5: #{tpu_custom_call.1} parent=1 // pred_fallthru
      _
    // Predicated region
    $region6: #{tpu_custom_call.1} parent=1 // pred_check
      _
    $region7: #{tpu_custom_call.1} parent=1 // pred_check_branch
      %14 = sbr.rel (0) target = $region9
    $region8: #{tpu_custom_call.1} parent=1 // pred_region
      _
    $region9: #{tpu_custom_call.1} parent=1 // pred_fallthru
      _
    // Predicated region
    $region10: #{tpu_custom_call.1} parent=1 // pred_check
      _
    $region11: #{tpu_custom_call.1} parent=1 // pred_check_branch
      %16 = sbr.rel (0) target = $region13
    $region12: #{tpu_custom_call.1} parent=1 // pred_region
      _
    $region13: #{tpu_custom_call.1} parent=1 // pred_fallthru
      _
    // Predicated region
    $region14: #{tpu_custom_call.1} parent=1 // pred_check
      _
    $region15: #{tpu_custom_call.1} parent=1 // pred_check_branch
      %18 = sbr.rel (0) target = $region17
    $region16: #{tpu_custom_call.1} parent=1 // pred_region
      _
    $region17: #{tpu_custom_call.1} parent=1 // pred_fallthru
      _
    // Predicated region
    $region18: #{tpu_custom_call.1} parent=1 // pred_check
      _
    $region19: #{tpu_custom_call.1} parent=1 // pred_check_branch
      %20 = sbr.rel (0) target = $region21
    $region20: #{tpu_custom_call.1} parent=1 // pred_region
      _
    $region21: #{tpu_custom_call.1} parent=1 // pred_fallthru
      _
    %p21 = scmp.eq.s32.totalorder 0, 0
    // Predicated region
    $region22: #{tpu_custom_call.1} parent=1 // pred_check
      %p22 = pneg %p21
    $region23: #{tpu_custom_call.1} parent=1 // pred_check_branch
      %24 = sbr.rel (%p22) target = $region25
    $region24: #{tpu_custom_call.1} parent=1 // pred_region
      %25 = vst [vmem:[#allocation2] sm:$0xff] 0.0
    $region25: #{tpu_custom_call.1} parent=1 // pred_fallthru
      _
    %v26 = vld [vmem:[%s0] sm:$0xff]
    %v27 = vld [vmem:[%s2] sm:$0xff]
    %v28 = vld [vmem:[%s2 + $0x8] sm:$0xff]
    %v29 = vld [vmem:[%s2 + $0x10] sm:$0xff]
    %v30 = vld [vmem:[%s2 + $0x18] sm:$0xff]
    %v31 = vld [vmem:[%s2 + $0x20] sm:$0xff]
    %v32 = vld [vmem:[%s2 + $0x28] sm:$0xff]
    %v33 = vld [vmem:[%s2 + $0x30] sm:$0xff]
    %v34 = vld [vmem:[%s2 + $0x38] sm:$0xff]
    %v35 = vld [vmem:[%s2 + $0x40] sm:$0xff]
    %v36 = vld [vmem:[%s2 + $0x48] sm:$0xff]
    %v37 = vld [vmem:[%s2 + $0x50] sm:$0xff]
    %v38 = vld [vmem:[%s2 + $0x58] sm:$0xff]
    %v39 = vld [vmem:[%s2 + $0x60] sm:$0xff]
    %v40 = vld [vmem:[%s2 + $0x68] sm:$0xff]
    %v41 = vld [vmem:[%s2 + $0x70] sm:$0xff]
    %v42 = vld [vmem:[%s2 + $0x78] sm:$0xff]
    %vm43 = vcmask 261120
    %v45 = vsel %vm43, %v26, 0
    %v48 = vsel %vm43, %v27, 0
    %v51 = vsel %vm43, %v28, 0
    %v54 = vsel %vm43, %v29, 0
    %v57 = vsel %vm43, %v30, 0
    %v60 = vsel %vm43, %v31, 0
    %v63 = vsel %vm43, %v32, 0
    %v66 = vsel %vm43, %v33, 0
    %v69 = vsel %vm43, %v34, 0
    %v72 = vsel %vm43, %v35, 0
    %v75 = vsel %vm43, %v36, 0
    %v78 = vsel %vm43, %v37, 0
    %v81 = vsel %vm43, %v38, 0
    %v84 = vsel %vm43, %v39, 0
    %v87 = vsel %vm43, %v40, 0
    %v90 = vsel %vm43, %v41, 0
    %v93 = vsel %vm43, %v42, 0
    %95 = vmatpush.xpose.msra.mxu0 %v93
    %96 = vmatpush.xpose.msra.mxu0 %v90
    %97 = vmatpush.xpose.msra.mxu0 %v87
    %98 = vmatpush.xpose.msra.mxu0 %v84
    %99 = vmatpush.xpose.msra.mxu0 %v81
    %100 = vmatpush.xpose.msra.mxu0 %v78
    %101 = vmatpush.xpose.msra.mxu0 %v75
    %102 = vmatpush.xpose.msra.mxu0 %v72
    %103 = vmatpush.xpose.msra.mxu0 %v69
    %104 = vmatpush.xpose.msra.mxu0 %v66
    %105 = vmatpush.xpose.msra.mxu0 %v63
    %106 = vmatpush.xpose.msra.mxu0 %v60
    %107 = vmatpush.xpose.msra.mxu0 %v57
    %108 = vmatpush.xpose.msra.mxu0 %v54
    %109 = vmatpush.xpose.msra.mxu0 %v51
    %110 = vmatpush.xpose.msra.mxu0 %v48
    %111 = vmatmul.f32.gmra.mxu0 %v45
    %v112 = vpop.f32.mrf.mxu0
    %v113 = vadd.f32 0.0, %v112
    %114 = vdwg.mxu0
    %v115 = vld [vmem:[%s1] sm:$0xff]
    %v116 = vld [vmem:[%s3] sm:$0x1]
    %118 = vset.pattern.permute.xlu0 0
    %119 = vperm.xlu0 %118, %v115
    %v120 = vpop.permute.xlu0 %119
    %v123 = vperm.slane %v116, 0
    %v125 = vadd.f32 %v120, %v123
    %v126 = vmul.f32 %v113, 2.0
    %v127 = vsub.f32 %v125, %v126
    %v128 = vmax.f32 %v127, 0.0
    %v129 = vmul.f32 %v128, -0.5
    %v130 = vmul.f32 %v129, 1.442695
    %v131 = vpow.pop %v130
    %v132 = vld [vmem:[#allocation2] sm:$0xff]
    %v133 = vld [vmem:[%s4] sm:$0xff]
    %v134 = vld [vmem:[%s4 + $0x8] sm:$0xff]
    %v135 = vld [vmem:[%s4 + $0x10] sm:$0xff]
    %v136 = vld [vmem:[%s4 + $0x18] sm:$0xff]
    %v137 = vld [vmem:[%s4 + $0x20] sm:$0xff]
    %v138 = vld [vmem:[%s4 + $0x28] sm:$0xff]
    %v139 = vld [vmem:[%s4 + $0x30] sm:$0xff]
    %v140 = vld [vmem:[%s4 + $0x38] sm:$0xff]
    %v141 = vld [vmem:[%s4 + $0x40] sm:$0xff]
    %v142 = vld [vmem:[%s4 + $0x48] sm:$0xff]
    %v143 = vld [vmem:[%s4 + $0x50] sm:$0xff]
    %v144 = vld [vmem:[%s4 + $0x58] sm:$0xff]
    %v145 = vld [vmem:[%s4 + $0x60] sm:$0xff]
    %v146 = vld [vmem:[%s4 + $0x68] sm:$0xff]
    %v147 = vld [vmem:[%s4 + $0x70] sm:$0xff]
    %v148 = vld [vmem:[%s4 + $0x78] sm:$0xff]
    %149 = vmatpush.msra.mxu0 %v148
    %150 = vmatpush.msra.mxu0 %v147
    %151 = vmatpush.msra.mxu0 %v146
    %152 = vmatpush.msra.mxu0 %v145
    %153 = vmatpush.msra.mxu0 %v144
    %154 = vmatpush.msra.mxu0 %v143
    %155 = vmatpush.msra.mxu0 %v142
    %156 = vmatpush.msra.mxu0 %v141
    %157 = vmatpush.msra.mxu0 %v140
    %158 = vmatpush.msra.mxu0 %v139
    %159 = vmatpush.msra.mxu0 %v138
    %160 = vmatpush.msra.mxu0 %v137
    %161 = vmatpush.msra.mxu0 %v136
    %162 = vmatpush.msra.mxu0 %v135
    %163 = vmatpush.msra.mxu0 %v134
    %164 = vmatpush.msra.mxu0 %v133
    %165 = vmatmul.f32.gmra.mxu0 %v131
    %v166 = vpop.f32.mrf.mxu0
    %v167 = vadd.f32 0.0, %v166
    %168 = vdwg.mxu0
    %v169 = vadd.f32 %v132, %v167
    %170 = vst [vmem:[#allocation2] sm:$0xff] %v169
    // Predicated region
    $region26: #{tpu_custom_call.1} parent=1 // pred_check
      %p171 = pneg %p21
    $region27: #{tpu_custom_call.1} parent=1 // pred_check_branch
      %173 = sbr.rel (%p171) target = $region29
    $region28: #{tpu_custom_call.1} parent=1 // pred_region
      %v174 = vld [vmem:[#allocation2] sm:$0xff]
      %175 = vst [vmem:[#allocation3] sm:$0xff] %v174
    $region29: #{tpu_custom_call.1} parent=1 // pred_fallthru
      _
    // Predicated region
    $region30: #{tpu_custom_call.1} parent=1 // pred_check
      _
    $region31: #{tpu_custom_call.1} parent=1 // pred_check_branch
      %177 = sbr.rel (0) target = $region33
    $region32: #{tpu_custom_call.1} parent=1 // pred_region
      %179 = vsyncadd [#allocation4], 0
      %s181 = sshll.u32 [#allocation3], 4
      %s182 = int_to_ptr.vmem [resolvable:$true] %s181
      %s183 = sshll.u32 %s5, 4
      %s184 = int_to_ptr.hbm [resolvable:$true] %s183
      %186 = dma.vmem_to_hbm [thread:$0]  %s182, 128, %s184, [#allocation4]
    $region33: #{tpu_custom_call.1} parent=1 // pred_fallthru
      _
    // Predicated region
    $region34: #{tpu_custom_call.1} parent=1 // pred_check
      _
    $region35: #{tpu_custom_call.1} parent=1 // pred_check_branch
      %188 = sbr.rel (0) target = $region37
    $region36: #{tpu_custom_call.1} parent=1 // pred_region
      %190 = dma.done [#allocation4], 128
    $region37: #{tpu_custom_call.1} parent=1 // pred_fallthru
      _
    %191 = vsyncpa [#allocation4], 1

</llo_original>
